<compile_context>
chip_gen: v7x
topology: tpu7x:2x2x1
jax: 0.10.0
libtpu: 0.0.40
codegen_flags: <defaults>
</compile_context>

<pallas_src>
import jax
import jax.numpy as jnp
from jax.experimental import pallas as pl
from jax.experimental.pallas import tpu as pltpu

KK = 105      # logical hidden width from the original module
H_PAD = 128   # lane-aligned hidden width used inside the kernel


def _round_up(n, m):
    return ((n + m - 1) // m) * m


def _flap_q_kernel(task_ref, x_ref, a_ref,
                   w0x_ref, w0a_ref, b0_ref, w1_ref, b1_ref, w2_ref, b2_ref,
                   hw_ref, hb_ref, out_ref):
    # task_ref (SMEM) is consumed by the head BlockSpec index_maps; unused here.
    del task_ref
    # Layer 0 with the concat folded into the kernel as a split matmul.
    h = jnp.dot(x_ref[...], w0x_ref[...], preferred_element_type=jnp.float32)
    h = h + jnp.dot(a_ref[...], w0a_ref[...], preferred_element_type=jnp.float32)
    h = jnp.maximum(h + b0_ref[...], 0.0)
    h = jnp.maximum(
        jnp.dot(h, w1_ref[...], preferred_element_type=jnp.float32) + b1_ref[...], 0.0)
    h = jnp.maximum(
        jnp.dot(h, w2_ref[...], preferred_element_type=jnp.float32) + b2_ref[...], 0.0)
    # Head: hw_ref is a (1, 1, H_PAD) lane-major block of the selected head.
    # VPU multiply + XLU lane reduction (MXU pass for a 1-column output is wasted).
    out_ref[...] = jnp.sum(h * hw_ref[0], axis=-1, keepdims=True) + hb_ref[0]


def flap_soft_q_forward(x, a, task, kparams, *, max_batch_tile=128):
    """Pallas implementation of FLAPSoftQNetwork.forward(x, a, task).

    `kparams` must come from `prepare_kernel_params` (lane-padded / split)."""
    x = x.astype(jnp.float32)
    a = a.astype(jnp.float32)
    B, obs_dim = x.shape
    act_dim = a.shape[1]
    H = kparams["w1"].shape[0]  # padded hidden width (128)

    # Tile the batch; weights stay resident across batch tiles (constant
    # block indices) and the batch axis is "parallel" for v7x's two TCs.
    TB = min(max_batch_tile, _round_up(B, 8))
    B_pad = _round_up(B, TB)
    if B_pad != B:
        x = jnp.pad(x, ((0, B_pad - B), (0, 0)))
        a = jnp.pad(a, ((0, B_pad - B), (0, 0)))
    n_tiles = B_pad // TB

    task_arr = jnp.asarray([task], dtype=jnp.int32)

    grid_spec = pltpu.PrefetchScalarGridSpec(
        num_scalar_prefetch=1,
        grid=(n_tiles,),
        in_specs=[
            pl.BlockSpec((TB, obs_dim), lambda i, t: (i, 0)),       # x
            pl.BlockSpec((TB, act_dim), lambda i, t: (i, 0)),       # a
            pl.BlockSpec((obs_dim, H),  lambda i, t: (0, 0)),       # w0 (obs rows)
            pl.BlockSpec((act_dim, H),  lambda i, t: (0, 0)),       # w0 (act rows)
            pl.BlockSpec((1, H),        lambda i, t: (0, 0)),       # b0
            pl.BlockSpec((H, H),        lambda i, t: (0, 0)),       # w1
            pl.BlockSpec((1, H),        lambda i, t: (0, 0)),       # b1
            pl.BlockSpec((H, H),        lambda i, t: (0, 0)),       # w2
            pl.BlockSpec((1, H),        lambda i, t: (0, 0)),       # b2
            # head weights/bias: stacked over tasks; the scalar-prefetched task
            # index picks which head block gets DMA'd into VMEM.
            pl.BlockSpec((1, 1, H),     lambda i, t: (t[0], 0, 0)),  # head_w (lane-major)
            pl.BlockSpec((1, 1, 1),     lambda i, t: (t[0], 0, 0)),  # head_b
        ],
        out_specs=pl.BlockSpec((TB, 1), lambda i, t: (i, 0)),
    )

    out = pl.pallas_call(
        _flap_q_kernel,
        out_shape=jax.ShapeDtypeStruct((B_pad, 1), jnp.float32),
        grid_spec=grid_spec,
        compiler_params=pltpu.CompilerParams(
            dimension_semantics=("parallel",)),
    )(task_arr, x, a,
      kparams["w0x"], kparams["w0a"], kparams["b0"],
      kparams["w1"], kparams["b1"], kparams["w2"], kparams["b2"],
      kparams["head_w"], kparams["head_b"])

    return out if B_pad == B else out[:B]


def init_params(key, in_dim, n_tasks, net_arch=(KK, KK, KK)):
    """Deterministic init mimicking torch.nn.Linear defaults (U(-k, k), k=1/sqrt(fan_in)).
    Logical (unpadded) params; weights stored as [in, out]."""
    dims = [in_dim] + list(net_arch)
    keys = jax.random.split(key, 2 * len(net_arch) + 2)
    params = {}
    for li in range(len(net_arch)):
        fan_in, fan_out = dims[li], dims[li + 1]
        k = 1.0 / jnp.sqrt(jnp.float32(fan_in))
        params[f"w{li}"] = jax.random.uniform(
            keys[2 * li], (fan_in, fan_out), jnp.float32, -k, k)
        params[f"b{li}"] = jax.random.uniform(
            keys[2 * li + 1], (1, fan_out), jnp.float32, -k, k)
    H = net_arch[-1]
    kh = 1.0 / jnp.sqrt(jnp.float32(H))
    params["head_w"] = jax.random.uniform(
        keys[-2], (n_tasks, H, 1), jnp.float32, -kh, kh)
    params["head_b"] = jax.random.uniform(
        keys[-1], (n_tasks, 1, 1), jnp.float32, -kh, kh)
    return params


def prepare_kernel_params(params, obs_dim, h_pad=H_PAD):
    """One-time prep: zero-pad hidden width to `h_pad`, split w0 into obs/act
    halves, and store the head weight lane-major (n_tasks, 1, h_pad).

    Zero padding keeps the live 105 columns bit-identical: padded weight
    rows/cols and padded biases are 0, ReLU(0)=0, and padded head lanes are 0,
    so nothing leaks into the output."""
    H = params["w1"].shape[0]
    pc = h_pad - H  # column padding

    def pad_cols(m):
        return jnp.pad(m, ((0, 0), (0, pc)))

    w0 = pad_cols(params["w0"])                       # (obs+act, h_pad)
    w0x = w0[:obs_dim]                                # (obs, h_pad)
    w0a = w0[obs_dim:]                                # (act, h_pad)
    w1 = jnp.pad(params["w1"], ((0, pc), (0, pc)))    # (h_pad, h_pad)
    w2 = jnp.pad(params["w2"], ((0, pc), (0, pc)))
    b0 = pad_cols(params["b0"])                       # (1, h_pad)
    b1 = pad_cols(params["b1"])
    b2 = pad_cols(params["b2"])
    head_w = jnp.transpose(params["head_w"], (0, 2, 1))   # (n_tasks, 1, H)
    head_w = jnp.pad(head_w, ((0, 0), (0, 0), (0, pc)))   # (n_tasks, 1, h_pad)
    head_b = params["head_b"]                              # (n_tasks, 1, 1)
    return dict(w0x=w0x, w0a=w0a, b0=b0, w1=w1, b1=b1, w2=w2, b2=b2,
                head_w=head_w, head_b=head_b)


def reference_forward(x, a, task, params):
    """Pure-JAX reference (unpadded, logical params) for correctness checking."""
    h = jnp.concatenate([x, a], axis=1)
    h = jnp.maximum(h @ params["w0"] + params["b0"], 0.0)
    h = jnp.maximum(h @ params["w1"] + params["b1"], 0.0)
    h = jnp.maximum(h @ params["w2"] + params["b2"], 0.0)
    return h @ params["head_w"][task] + params["head_b"][task, 0]


if __name__ == "__main__":
    # Small shapes consistent with the module: obs=(16,), act=(4,) -> ins=20.
    B, OBS_DIM, ACT_DIM, N_TASKS = 8, 16, 4, 3
    TASK = 1

    root = jax.random.PRNGKey(0)
    kx, ka, kp = jax.random.split(root, 3)
    x = jax.random.normal(kx, (B, OBS_DIM), jnp.float32)
    a = jax.random.normal(ka, (B, ACT_DIM), jnp.float32)
    params = init_params(kp, OBS_DIM + ACT_DIM, N_TASKS)
    kparams = prepare_kernel_params(params, OBS_DIM)   # one-time prep

    out = flap_soft_q_forward(x, a, TASK, kparams)
    out = jax.block_until_ready(out)
    ref = reference_forward(x, a, TASK, params)
    assert out.shape == (B, 1), out.shape
    assert jnp.allclose(out, ref, atol=1e-4, rtol=1e-4), (out, ref)

    # Larger batch exercising the tiled batch grid (grid > 1, with padding).
    B2 = 200
    kx2, ka2 = jax.random.split(jax.random.PRNGKey(1), 2)
    x2 = jax.random.normal(kx2, (B2, OBS_DIM), jnp.float32)
    a2 = jax.random.normal(ka2, (B2, ACT_DIM), jnp.float32)
    out2 = jax.block_until_ready(flap_soft_q_forward(x2, a2, 2, kparams))
    ref2 = reference_forward(x2, a2, 2, params)
    assert out2.shape == (B2, 1), out2.shape
    assert jnp.allclose(out2, ref2, atol=1e-4, rtol=1e-4)

    print("KERNEL_OK")
</pallas_src>

<mosaic_0001>
module attributes {stable_mosaic.version = 11 : i64} {
  func.func @_flap_q_kernel(%arg0: i32, %arg1: memref<1xi32, #tpu.memory_space<smem>>, %arg2: memref<8x16xf32, #tpu.memory_space<vmem>>, %arg3: memref<8x4xf32, #tpu.memory_space<vmem>>, %arg4: memref<16x128xf32, #tpu.memory_space<vmem>>, %arg5: memref<4x128xf32, #tpu.memory_space<vmem>>, %arg6: memref<1x128xf32, #tpu.memory_space<vmem>>, %arg7: memref<128x128xf32, #tpu.memory_space<vmem>>, %arg8: memref<1x128xf32, #tpu.memory_space<vmem>>, %arg9: memref<128x128xf32, #tpu.memory_space<vmem>>, %arg10: memref<1x128xf32, #tpu.memory_space<vmem>>, %arg11: memref<1x1x128xf32, #tpu.memory_space<vmem>>, %arg12: memref<1x1x1xf32, #tpu.memory_space<vmem>>, %arg13: memref<8x1xf32, #tpu.memory_space<vmem>>) attributes {dimension_semantics = [#tpu.dimension_semantics<parallel>], iteration_bounds = array<i64: 1>, scalar_prefetch = 1 : i64, scratch_operands = 0 : i64, tpu.core_type = #tpu.core_type<tc>, window_params = [{transform_indices = @transform_0, window_bounds = array<i64: 8, 16>}, {transform_indices = @transform_1, window_bounds = array<i64: 8, 4>}, {pipeline_mode = #tpu.pipeline_mode<synchronous>, transform_indices = @transform_2, window_bounds = array<i64: 16, 128>}, {pipeline_mode = #tpu.pipeline_mode<synchronous>, transform_indices = @transform_3, window_bounds = array<i64: 4, 128>}, {pipeline_mode = #tpu.pipeline_mode<synchronous>, transform_indices = @transform_4, window_bounds = array<i64: 1, 128>}, {pipeline_mode = #tpu.pipeline_mode<synchronous>, transform_indices = @transform_5, window_bounds = array<i64: 128, 128>}, {pipeline_mode = #tpu.pipeline_mode<synchronous>, transform_indices = @transform_6, window_bounds = array<i64: 1, 128>}, {pipeline_mode = #tpu.pipeline_mode<synchronous>, transform_indices = @transform_7, window_bounds = array<i64: 128, 128>}, {pipeline_mode = #tpu.pipeline_mode<synchronous>, transform_indices = @transform_8, window_bounds = array<i64: 1, 128>}, {transform_indices = @transform_9, window_bounds = array<i64: 1, 1, 128>}, {transform_indices = @transform_10, window_bounds = array<i64: 1, 1, 1>}, {transform_indices = @transform_11, window_bounds = array<i64: 8, 1>}]} {
    %c0 = arith.constant 0 : index
    %c0_0 = arith.constant 0 : index
    %0 = vector.load %arg2[%c0, %c0_0] : memref<8x16xf32, #tpu.memory_space<vmem>>, vector<8x16xf32>
    %c0_1 = arith.constant 0 : index
    %c0_2 = arith.constant 0 : index
    %1 = vector.load %arg4[%c0_1, %c0_2] : memref<16x128xf32, #tpu.memory_space<vmem>>, vector<16x128xf32>
    %cst = arith.constant dense<0.000000e+00> : vector<8x128xf32>
    %2 = tpu.matmul %0, %1, %cst {dimension_numbers = #tpu.dot_dimension_numbers<[1], [0], [0], [1], [0, 0, 1, 1], [], []>} : vector<8x16xf32>, vector<16x128xf32>, vector<8x128xf32> -> vector<8x128xf32>
    %c0_3 = arith.constant 0 : index
    %c0_4 = arith.constant 0 : index
    %3 = vector.load %arg3[%c0_3, %c0_4] : memref<8x4xf32, #tpu.memory_space<vmem>>, vector<8x4xf32>
    %c0_5 = arith.constant 0 : index
    %c0_6 = arith.constant 0 : index
    %4 = vector.load %arg5[%c0_5, %c0_6] : memref<4x128xf32, #tpu.memory_space<vmem>>, vector<4x128xf32>
    %cst_7 = arith.constant dense<0.000000e+00> : vector<8x128xf32>
    %5 = tpu.matmul %3, %4, %cst_7 {dimension_numbers = #tpu.dot_dimension_numbers<[1], [0], [0], [1], [0, 0, 1, 1], [], []>} : vector<8x4xf32>, vector<4x128xf32>, vector<8x128xf32> -> vector<8x128xf32>
    %6 = arith.addf %2, %5 : vector<8x128xf32>
    %c0_8 = arith.constant 0 : index
    %c0_9 = arith.constant 0 : index
    %7 = vector.load %arg6[%c0_8, %c0_9] : memref<1x128xf32, #tpu.memory_space<vmem>>, vector<1x128xf32>
    %8 = vector.broadcast %7 : vector<1x128xf32> to vector<8x128xf32>
    %9 = arith.addf %6, %8 : vector<8x128xf32>
    %cst_10 = arith.constant 0.000000e+00 : f32
    %10 = vector.broadcast %cst_10 : f32 to vector<8x128xf32>
    %11 = arith.maximumf %9, %10 : vector<8x128xf32>
    %c0_11 = arith.constant 0 : index
    %c0_12 = arith.constant 0 : index
    %12 = vector.load %arg7[%c0_11, %c0_12] : memref<128x128xf32, #tpu.memory_space<vmem>>, vector<128x128xf32>
    %cst_13 = arith.constant dense<0.000000e+00> : vector<8x128xf32>
    %13 = tpu.matmul %11, %12, %cst_13 {dimension_numbers = #tpu.dot_dimension_numbers<[1], [0], [0], [1], [0, 0, 1, 1], [], []>} : vector<8x128xf32>, vector<128x128xf32>, vector<8x128xf32> -> vector<8x128xf32>
    %c0_14 = arith.constant 0 : index
    %c0_15 = arith.constant 0 : index
    %14 = vector.load %arg8[%c0_14, %c0_15] : memref<1x128xf32, #tpu.memory_space<vmem>>, vector<1x128xf32>
    %15 = vector.broadcast %14 : vector<1x128xf32> to vector<8x128xf32>
    %16 = arith.addf %13, %15 : vector<8x128xf32>
    %cst_16 = arith.constant 0.000000e+00 : f32
    %17 = vector.broadcast %cst_16 : f32 to vector<8x128xf32>
    %18 = arith.maximumf %16, %17 : vector<8x128xf32>
    %c0_17 = arith.constant 0 : index
    %c0_18 = arith.constant 0 : index
    %19 = vector.load %arg9[%c0_17, %c0_18] : memref<128x128xf32, #tpu.memory_space<vmem>>, vector<128x128xf32>
    %cst_19 = arith.constant dense<0.000000e+00> : vector<8x128xf32>
    %20 = tpu.matmul %18, %19, %cst_19 {dimension_numbers = #tpu.dot_dimension_numbers<[1], [0], [0], [1], [0, 0, 1, 1], [], []>} : vector<8x128xf32>, vector<128x128xf32>, vector<8x128xf32> -> vector<8x128xf32>
    %c0_20 = arith.constant 0 : index
    %c0_21 = arith.constant 0 : index
    %21 = vector.load %arg10[%c0_20, %c0_21] : memref<1x128xf32, #tpu.memory_space<vmem>>, vector<1x128xf32>
    %22 = vector.broadcast %21 : vector<1x128xf32> to vector<8x128xf32>
    %23 = arith.addf %20, %22 : vector<8x128xf32>
    %cst_22 = arith.constant 0.000000e+00 : f32
    %24 = vector.broadcast %cst_22 : f32 to vector<8x128xf32>
    %25 = arith.maximumf %23, %24 : vector<8x128xf32>
    %c0_23 = arith.constant 0 : index
    %c0_24 = arith.constant 0 : index
    %c0_25 = arith.constant 0 : index
    %26 = vector.load %arg11[%c0_23, %c0_24, %c0_25] : memref<1x1x128xf32, #tpu.memory_space<vmem>>, vector<1x1x128xf32>
    %27 = vector.shape_cast %26 : vector<1x1x128xf32> to vector<1x128xf32>
    %28 = vector.broadcast %27 : vector<1x128xf32> to vector<8x128xf32>
    %29 = arith.mulf %25, %28 : vector<8x128xf32>
    %cst_26 = arith.constant dense<0.000000e+00> : vector<8xf32>
    %30 = vector.multi_reduction <add>, %29, %cst_26 [1] : vector<8x128xf32> to vector<8xf32>
    %31 = vector.shape_cast %30 : vector<8xf32> to vector<8x1xf32>
    %c0_27 = arith.constant 0 : index
    %c0_28 = arith.constant 0 : index
    %c0_29 = arith.constant 0 : index
    %32 = vector.load %arg12[%c0_27, %c0_28, %c0_29] : memref<1x1x1xf32, #tpu.memory_space<vmem>>, vector<1x1x1xf32>
    %33 = vector.shape_cast %32 : vector<1x1x1xf32> to vector<1x1xf32>
    %34 = vector.broadcast %33 : vector<1x1xf32> to vector<8x1xf32>
    %35 = arith.addf %31, %34 : vector<8x1xf32>
    %c0_30 = arith.constant 0 : index
    %c0_31 = arith.constant 0 : index
    %36 = vector.load %arg13[%c0_30, %c0_31] : memref<8x1xf32, #tpu.memory_space<vmem>>, vector<8x1xf32>
    tpu.vector_store %arg13[%c0_30, %c0_31], %35 {strides = array<i32>} : memref<8x1xf32, #tpu.memory_space<vmem>>, vector<8x1xf32>,
    return
  }
  func.func @transform_0(%arg0: i32, %arg1: memref<1xi32, #tpu.memory_space<smem>>) -> (i32, i32) {
    %c0_i32 = arith.constant 0 : i32
    %c0_i32_0 = arith.constant 0 : i32
    return %arg0, %c0_i32 : i32, i32
  }
  func.func @transform_1(%arg0: i32, %arg1: memref<1xi32, #tpu.memory_space<smem>>) -> (i32, i32) {
    %c0_i32 = arith.constant 0 : i32
    %c0_i32_0 = arith.constant 0 : i32
    return %arg0, %c0_i32 : i32, i32
  }
  func.func @transform_2(%arg0: i32, %arg1: memref<1xi32, #tpu.memory_space<smem>>) -> (i32, i32) {
    %c0_i32 = arith.constant 0 : i32
    %c0_i32_0 = arith.constant 0 : i32
    %c0_i32_1 = arith.constant 0 : i32
    return %c0_i32, %c0_i32_0 : i32, i32
  }
  func.func @transform_3(%arg0: i32, %arg1: memref<1xi32, #tpu.memory_space<smem>>) -> (i32, i32) {
    %c0_i32 = arith.constant 0 : i32
    %c0_i32_0 = arith.constant 0 : i32
    %c0_i32_1 = arith.constant 0 : i32
    return %c0_i32, %c0_i32_0 : i32, i32
  }
  func.func @transform_4(%arg0: i32, %arg1: memref<1xi32, #tpu.memory_space<smem>>) -> (i32, i32) {
    %c0_i32 = arith.constant 0 : i32
    %c0_i32_0 = arith.constant 0 : i32
    %c0_i32_1 = arith.constant 0 : i32
    return %c0_i32, %c0_i32_0 : i32, i32
  }
  func.func @transform_5(%arg0: i32, %arg1: memref<1xi32, #tpu.memory_space<smem>>) -> (i32, i32) {
    %c0_i32 = arith.constant 0 : i32
    %c0_i32_0 = arith.constant 0 : i32
    %c0_i32_1 = arith.constant 0 : i32
    return %c0_i32, %c0_i32_0 : i32, i32
  }
  func.func @transform_6(%arg0: i32, %arg1: memref<1xi32, #tpu.memory_space<smem>>) -> (i32, i32) {
    %c0_i32 = arith.constant 0 : i32
    %c0_i32_0 = arith.constant 0 : i32
    %c0_i32_1 = arith.constant 0 : i32
    return %c0_i32, %c0_i32_0 : i32, i32
  }
  func.func @transform_7(%arg0: i32, %arg1: memref<1xi32, #tpu.memory_space<smem>>) -> (i32, i32) {
    %c0_i32 = arith.constant 0 : i32
    %c0_i32_0 = arith.constant 0 : i32
    %c0_i32_1 = arith.constant 0 : i32
    return %c0_i32, %c0_i32_0 : i32, i32
  }
  func.func @transform_8(%arg0: i32, %arg1: memref<1xi32, #tpu.memory_space<smem>>) -> (i32, i32) {
    %c0_i32 = arith.constant 0 : i32
    %c0_i32_0 = arith.constant 0 : i32
    %c0_i32_1 = arith.constant 0 : i32
    return %c0_i32, %c0_i32_0 : i32, i32
  }
  func.func @transform_9(%arg0: i32, %arg1: memref<1xi32, #tpu.memory_space<smem>>) -> (i32, i32, i32) {
    %c0 = arith.constant 0 : index
    %0 = memref.load %arg1[%c0] : memref<1xi32, #tpu.memory_space<smem>>
    %c0_i32 = arith.constant 0 : i32
    %c0_i32_0 = arith.constant 0 : i32
    %c0_i32_1 = arith.constant 0 : i32
    return %0, %c0_i32, %c0_i32_0 : i32, i32, i32
  }
  func.func @transform_10(%arg0: i32, %arg1: memref<1xi32, #tpu.memory_space<smem>>) -> (i32, i32, i32) {
    %c0 = arith.constant 0 : index
    %0 = memref.load %arg1[%c0] : memref<1xi32, #tpu.memory_space<smem>>
    %c0_i32 = arith.constant 0 : i32
    %c0_i32_0 = arith.constant 0 : i32
    %c0_i32_1 = arith.constant 0 : i32
    return %0, %c0_i32, %c0_i32_0 : i32, i32, i32
  }
  func.func @transform_11(%arg0: i32, %arg1: memref<1xi32, #tpu.memory_space<smem>>) -> (i32, i32) {
    %c0_i32 = arith.constant 0 : i32
    %c0_i32_0 = arith.constant 0 : i32
    return %arg0, %c0_i32 : i32, i32
  }
}

</mosaic_0001>

<llo_original>
// kernel: tpu_custom_call.1
$region0: #{tpu_custom_call.1}
  #allocation0 [shape = 'u32[]', space=smem, size = 0x4, offset = 0x4, fixed_abs, tag = 'smem constant byte address 0x4 - core index']
  #allocation1 [shape = 'u32[144,128]{1,0:T(1,128)}', space=vmem, size = 0x12000, scoped, tag = 'internal scratch']
  #allocation2 [shape = 's32[1]{0}', space=sflag, size = 0x4, scoped, tag = 'scoped memory for tpu_custom_call.1']
  #allocation3 [shape = 's32[1]{0:T(128)S(6)}', space=smem, size = 0x200, scoped, tag = 'prefetched SMEM operand 0']
  %s0 = inlined_call_operand.<no memory space> [shape: s32[1], index: 0, kind: input, shape index: {}]
  %s1 = inlined_call_operand.vmem [shape: f32[8,16], index: 1, kind: input, shape index: {}]
  %s2 = inlined_call_operand.vmem [shape: f32[8,4], index: 2, kind: input, shape index: {}]
  %s3 = inlined_call_operand.vmem [shape: f32[16,128], index: 3, kind: input, shape index: {}]
  %s4 = inlined_call_operand.vmem [shape: f32[4,128], index: 4, kind: input, shape index: {}]
  %s5 = inlined_call_operand.vmem [shape: f32[1,128], index: 5, kind: input, shape index: {}]
  %s6 = inlined_call_operand.hbm [shape: f32[128,128], index: 6, kind: input, shape index: {}]
  %s7 = inlined_call_operand.vmem [shape: f32[1,128], index: 7, kind: input, shape index: {}]
  %s8 = inlined_call_operand.hbm [shape: f32[128,128], index: 8, kind: input, shape index: {}]
  %s9 = inlined_call_operand.vmem [shape: f32[1,128], index: 9, kind: input, shape index: {}]
  %s10 = inlined_call_operand.vmem [shape: f32[3,1,128], index: 10, kind: input, shape index: {}]
  %s11 = inlined_call_operand.vmem [shape: f32[3,1,1], index: 11, kind: input, shape index: {}]
  %s12 = inlined_call_operand.vmem [shape: f32[8,1], index: 12, kind: output, shape index: {}]
  %s13 = sld [smem:[#allocation0]]
  $region62: #{tpu_custom_call.1} parent=0
    _
  %s15 = ssub.s32 1, %s13
  %s16 = scalar_select 0, %s15, %s13
  %17 = sst [smem:[#allocation3]] %s0
  $region1: #{tpu_custom_call.1} parent=0
    #allocation4 [shape = 'u8[65536]{0}', space=vmem, size = 0x10000, scoped, tag = 'input window, operand 6, single buffered']
    #allocation5 [shape = 's32[1]{0}', space=sflag, size = 0x4, scoped, tag = 'scoped memory for tpu_custom_call.1']
    #allocation6 [shape = 'u8[65536]{0}', space=vmem, size = 0x10000, scoped, tag = 'input window, operand 8, single buffered']
    #allocation7 [shape = 's32[1]{0}', space=sflag, size = 0x4, scoped, tag = 'scoped memory for tpu_custom_call.1']
    %18 = vsyncpa [#allocation5], 0
    %19 = vsyncpa [#allocation7], 0
    // Predicated region
    $region2: #{tpu_custom_call.1} parent=1 // pred_check
      _
    $region3: #{tpu_custom_call.1} parent=1 // pred_check_branch
      %21 = sbr.rel (0) target = $region5
    $region4: #{tpu_custom_call.1} parent=1 // pred_region
      _
    $region5: #{tpu_custom_call.1} parent=1 // pred_fallthru
      _
    // Predicated region
    $region6: #{tpu_custom_call.1} parent=1 // pred_check
      _
    $region7: #{tpu_custom_call.1} parent=1 // pred_check_branch
      %23 = sbr.rel (0) target = $region9
    $region8: #{tpu_custom_call.1} parent=1 // pred_region
      _
    $region9: #{tpu_custom_call.1} parent=1 // pred_fallthru
      _
    // Predicated region
    $region10: #{tpu_custom_call.1} parent=1 // pred_check
      _
    $region11: #{tpu_custom_call.1} parent=1 // pred_check_branch
      %25 = sbr.rel (0) target = $region13
    $region12: #{tpu_custom_call.1} parent=1 // pred_region
      _
    $region13: #{tpu_custom_call.1} parent=1 // pred_fallthru
      _
    // Predicated region
    $region14: #{tpu_custom_call.1} parent=1 // pred_check
      _
    $region15: #{tpu_custom_call.1} parent=1 // pred_check_branch
      %27 = sbr.rel (0) target = $region17
    $region16: #{tpu_custom_call.1} parent=1 // pred_region
      _
    $region17: #{tpu_custom_call.1} parent=1 // pred_fallthru
      _
    // Predicated region
    $region18: #{tpu_custom_call.1} parent=1 // pred_check
      _
    $region19: #{tpu_custom_call.1} parent=1 // pred_check_branch
      %29 = sbr.rel (0) target = $region21
    $region20: #{tpu_custom_call.1} parent=1 // pred_region
      _
    $region21: #{tpu_custom_call.1} parent=1 // pred_fallthru
      _
    // Predicated region
    $region22: #{tpu_custom_call.1} parent=1 // pred_check
      _
    $region23: #{tpu_custom_call.1} parent=1 // pred_check_branch
      %31 = sbr.rel (0) target = $region25
    $region24: #{tpu_custom_call.1} parent=1 // pred_region
      %s33 = ssub.s32 2048, 2048
      %34 = vsyncadd [#allocation5], %s33
      %s35 = sshll.u32 [#allocation4], 4
      %s36 = int_to_ptr.vmem [resolvable:$true] %s35
      %41 = dma.hbm_to_vmem [thread:$0]  %s6, 2048, %s36, [#allocation5], 128, 128, 8
    $region25: #{tpu_custom_call.1} parent=1 // pred_fallthru
      _
    // Predicated region
    $region26: #{tpu_custom_call.1} parent=1 // pred_check
      _
    $region27: #{tpu_custom_call.1} parent=1 // pred_check_branch
      %43 = sbr.rel (0) target = $region29
    $region28: #{tpu_custom_call.1} parent=1 // pred_region
      _
    $region29: #{tpu_custom_call.1} parent=1 // pred_fallthru
      _
    // Predicated region
    $region30: #{tpu_custom_call.1} parent=1 // pred_check
      _
    $region31: #{tpu_custom_call.1} parent=1 // pred_check_branch
      %45 = sbr.rel (0) target = $region33
    $region32: #{tpu_custom_call.1} parent=1 // pred_region
      %s47 = ssub.s32 2048, 2048
      %48 = vsyncadd [#allocation7], %s47
      %s49 = sshll.u32 [#allocation6], 4
      %s50 = int_to_ptr.vmem [resolvable:$true] %s49
      %55 = dma.hbm_to_vmem [thread:$0]  %s8, 2048, %s50, [#allocation7], 128, 128, 8
    $region33: #{tpu_custom_call.1} parent=1 // pred_fallthru
      _
    // Predicated region
    $region34: #{tpu_custom_call.1} parent=1 // pred_check
      _
    $region35: #{tpu_custom_call.1} parent=1 // pred_check_branch
      %57 = sbr.rel (0) target = $region37
    $region36: #{tpu_custom_call.1} parent=1 // pred_region
      _
    $region37: #{tpu_custom_call.1} parent=1 // pred_fallthru
      _
    // Predicated region
    $region38: #{tpu_custom_call.1} parent=1 // pred_check
      _
    $region39: #{tpu_custom_call.1} parent=1 // pred_check_branch
      %59 = sbr.rel (0) target = $region41
    $region40: #{tpu_custom_call.1} parent=1 // pred_region
      %s60 = sld [smem:[#allocation3]]
      %p61 = scmp.lt.s32.totalorder %s60, 2
      %s62 = scalar_select %p61, %s60, 2
      %s63 = scalar_lea.vmem %s10, %s62
      %s64 = sld [smem:[#allocation3]]
    $region41: #{tpu_custom_call.1} parent=1 // pred_fallthru
      _
    // Predicated region
    $region42: #{tpu_custom_call.1} parent=1 // pred_check
      _
    $region43: #{tpu_custom_call.1} parent=1 // pred_check_branch
      %66 = sbr.rel (0) target = $region45
    $region44: #{tpu_custom_call.1} parent=1 // pred_region
      %s67 = sld [smem:[#allocation3]]
      %p68 = scmp.lt.s32.totalorder %s67, 2
      %s69 = scalar_select %p68, %s67, 2
      %s70 = scalar_lea.vmem %s11, %s69
      %s71 = sld [smem:[#allocation3]]
    $region45: #{tpu_custom_call.1} parent=1 // pred_fallthru
      _
    // Predicated region
    $region46: #{tpu_custom_call.1} parent=1 // pred_check
      _
    $region47: #{tpu_custom_call.1} parent=1 // pred_check_branch
      %73 = sbr.rel (0) target = $region49
    $region48: #{tpu_custom_call.1} parent=1 // pred_region
      %74 = dma.done [#allocation5], 2048
    $region49: #{tpu_custom_call.1} parent=1 // pred_fallthru
      _
    // Predicated region
    $region50: #{tpu_custom_call.1} parent=1 // pred_check
      _
    $region51: #{tpu_custom_call.1} parent=1 // pred_check_branch
      %76 = sbr.rel (0) target = $region53
    $region52: #{tpu_custom_call.1} parent=1 // pred_region
      %77 = dma.done [#allocation7], 2048
    $region53: #{tpu_custom_call.1} parent=1 // pred_fallthru
      _
    %s78 = sld [smem:[#allocation3]]
    %p79 = scmp.lt.s32.totalorder %s78, 2
    %s80 = scalar_select %p79, %s78, 2
    %s81 = scalar_lea.vmem %s10, %s80
    %s82 = sld [smem:[#allocation3]]
    %p83 = scmp.lt.s32.totalorder %s82, 2
    %s84 = scalar_select %p83, %s82, 2
    %s85 = scalar_lea.vmem %s11, %s84
    %s86 = sld [smem:[#allocation3]]
    %p87 = scmp.lt.s32.totalorder %s86, 2
    %s88 = scalar_select %p87, %s86, 2
    %s89 = scalar_lea.vmem %s10, %s88
    %s90 = sld [smem:[#allocation3]]
    %s91 = sld [smem:[#allocation3]]
    %p92 = scmp.lt.s32.totalorder %s91, 2
    %s93 = scalar_select %p92, %s91, 2
    %s94 = scalar_lea.vmem %s11, %s93
    %s95 = sld [smem:[#allocation3]]
    %v96 = vld [vmem:[%s1] sm:$0xff]
    %v97 = vld [vmem:[%s3] sm:$0xff]
    %v98 = vld [vmem:[%s3 + $0x8] sm:$0xff]
    %v99 = vld [vmem:[%s2] sm:$0xff]
    %v100 = vld [vmem:[%s4] sm:$0xf]
    %vm101 = vcmask 31744
    %v103 = vsel %vm101, %v99, 0
    %vm105 = vcmask 1043456
    %v107 = vsel %vm105, %v100, 0
    %109 = vmatprep.subr.mxu0 0.0
    %110 = vmatpush1.msra.mxu0 %v107
    %111 = vmatprep.subr.mxu0 0.0
    %112 = vmatpush1.msra.mxu0 0.0
    %113 = vmatprep.subr.mxu0 0.0
    %114 = vmatpush1.msra.mxu0 0.0
    %115 = vmatprep.subr.mxu0 0.0
    %116 = vmatpush1.msra.mxu0 0.0
    %117 = vmatprep.subr.mxu0 0.0
    %118 = vmatpush1.msra.mxu0 0.0
    %119 = vmatprep.subr.mxu0 0.0
    %120 = vmatpush1.msra.mxu0 0.0
    %121 = vmatprep.subr.mxu0 0.0
    %122 = vmatpush1.msra.mxu0 0.0
    %123 = vmatprep.subr.mxu0 0.0
    %124 = vmatpush1.msra.mxu0 0.0
    %125 = vmatprep.subr.mxu0 0.0
    %126 = vmatpush1.msra.mxu0 0.0
    %127 = vmatprep.subr.mxu0 0.0
    %128 = vmatpush1.msra.mxu0 0.0
    %129 = vmatprep.subr.mxu0 0.0
    %130 = vmatpush1.msra.mxu0 0.0
    %131 = vmatprep.subr.mxu0 0.0
    %132 = vmatpush1.msra.mxu0 0.0
    %133 = vmatprep.subr.mxu0 0.0
    %134 = vmatpush1.msra.mxu0 0.0
    %135 = vmatprep.subr.mxu0 0.0
    %136 = vmatpush1.msra.mxu0 0.0
    %137 = vmatprep.subr.mxu0 0.0
    %138 = vmatpush1.msra.mxu0 0.0
    %139 = vmatprep.subr.mxu0 0.0
    %140 = vmatpush1.msra.mxu0 0.0
    %141 = vmatprep.subr.mxu0 0.0
    %142 = vmatpush1.msra.mxu0 0.0
    %143 = vmatprep.subr.mxu0 0.0
    %144 = vmatpush1.msra.mxu0 0.0
    %145 = vmatprep.subr.mxu0 0.0
    %146 = vmatpush1.msra.mxu0 0.0
    %147 = vmatprep.subr.mxu0 0.0
    %148 = vmatpush1.msra.mxu0 0.0
    %149 = vmatprep.subr.mxu0 0.0
    %150 = vmatpush1.msra.mxu0 0.0
    %151 = vmatprep.subr.mxu0 0.0
    %152 = vmatpush1.msra.mxu0 0.0
    %153 = vmatprep.subr.mxu0 0.0
    %154 = vmatpush1.msra.mxu0 0.0
    %155 = vmatprep.subr.mxu0 0.0
    %156 = vmatpush1.msra.mxu0 0.0
    %157 = vmatprep.subr.mxu0 0.0
    %158 = vmatpush1.msra.mxu0 0.0
    %159 = vmatprep.subr.mxu0 0.0
    %160 = vmatpush1.msra.mxu0 0.0
    %161 = vmatprep.subr.mxu0 0.0
    %162 = vmatpush1.msra.mxu0 0.0
    %163 = vmatprep.subr.mxu0 0.0
    %164 = vmatpush1.msra.mxu0 0.0
    %165 = vmatprep.subr.mxu0 0.0
    %166 = vmatpush1.msra.mxu0 0.0
    %167 = vmatprep.subr.mxu0 0.0
    %168 = vmatpush1.msra.mxu0 0.0
    %169 = vmatprep.subr.mxu0 0.0
    %170 = vmatpush1.msra.mxu0 0.0
    %171 = vmatprep.subr.mxu0 0.0
    %172 = vmatpush1.msra.mxu0 0.0
    %173 = vmatprep.mubr.f32.mxu0 0.0
    %174 = vmatmul.mubr.f32.gmra.mrb[0].mxu0 %v103
    %v175 = vpop.f32.mrb[0].mxu0
    %v176 = vadd.f32 0.0, %v175
    %v177 = vpop.f32.mrb[0].mxu0
    %178 = vdwg.mxu0
    %vm179 = vcmask 130048
    %v181 = vsel %vm179, %v96, 0
    %183 = vmatprep.subr.mxu0 0.0
    %184 = vmatpush1.msra.mxu0 %v97
    %185 = vmatprep.subr.mxu0 0.0
    %186 = vmatpush1.msra.mxu0 %v98
    %187 = vmatprep.subr.mxu0 0.0
    %188 = vmatpush1.msra.mxu0 0.0
    %189 = vmatprep.subr.mxu0 0.0
    %190 = vmatpush1.msra.mxu0 0.0
    %191 = vmatprep.subr.mxu0 0.0
    %192 = vmatpush1.msra.mxu0 0.0
    %193 = vmatprep.subr.mxu0 0.0
    %194 = vmatpush1.msra.mxu0 0.0
    %195 = vmatprep.subr.mxu0 0.0
    %196 = vmatpush1.msra.mxu0 0.0
    %197 = vmatprep.subr.mxu0 0.0
    %198 = vmatpush1.msra.mxu0 0.0
    %199 = vmatprep.subr.mxu0 0.0
    %200 = vmatpush1.msra.mxu0 0.0
    %201 = vmatprep.subr.mxu0 0.0
    %202 = vmatpush1.msra.mxu0 0.0
    %203 = vmatprep.subr.mxu0 0.0
    %204 = vmatpush1.msra.mxu0 0.0
    %205 = vmatprep.subr.mxu0 0.0
    %206 = vmatpush1.msra.mxu0 0.0
    %207 = vmatprep.subr.mxu0 0.0
    %208 = vmatpush1.msra.mxu0 0.0
    %209 = vmatprep.subr.mxu0 0.0
    %210 = vmatpush1.msra.mxu0 0.0
    %211 = vmatprep.subr.mxu0 0.0
    %212 = vmatpush1.msra.mxu0 0.0
    %213 = vmatprep.subr.mxu0 0.0
    %214 = vmatpush1.msra.mxu0 0.0
    %215 = vmatprep.subr.mxu0 0.0
    %216 = vmatpush1.msra.mxu0 0.0
    %217 = vmatprep.subr.mxu0 0.0
    %218 = vmatpush1.msra.mxu0 0.0
    %219 = vmatprep.subr.mxu0 0.0
    %220 = vmatpush1.msra.mxu0 0.0
    %221 = vmatprep.subr.mxu0 0.0
    %222 = vmatpush1.msra.mxu0 0.0
    %223 = vmatprep.subr.mxu0 0.0
    %224 = vmatpush1.msra.mxu0 0.0
    %225 = vmatprep.subr.mxu0 0.0
    %226 = vmatpush1.msra.mxu0 0.0
    %227 = vmatprep.subr.mxu0 0.0
    %228 = vmatpush1.msra.mxu0 0.0
    %229 = vmatprep.subr.mxu0 0.0
    %230 = vmatpush1.msra.mxu0 0.0
    %231 = vmatprep.subr.mxu0 0.0
    %232 = vmatpush1.msra.mxu0 0.0
    %233 = vmatprep.subr.mxu0 0.0
    %234 = vmatpush1.msra.mxu0 0.0
    %235 = vmatprep.subr.mxu0 0.0
    %236 = vmatpush1.msra.mxu0 0.0
    %237 = vmatprep.subr.mxu0 0.0
    %238 = vmatpush1.msra.mxu0 0.0
    %239 = vmatprep.subr.mxu0 0.0
    %240 = vmatpush1.msra.mxu0 0.0
    %241 = vmatprep.subr.mxu0 0.0
    %242 = vmatpush1.msra.mxu0 0.0
    %243 = vmatprep.subr.mxu0 0.0
    %244 = vmatpush1.msra.mxu0 0.0
    %245 = vmatprep.subr.mxu0 0.0
    %246 = vmatpush1.msra.mxu0 0.0
    %247 = vmatprep.mubr.f32.mxu0 0.0
    %248 = vmatmul.mubr.f32.gmra.mrb[0].mxu0 %v181
    %v249 = vpop.f32.mrb[0].mxu0
    %v250 = vadd.f32 %v176, %v249
    %v251 = vpop.f32.mrb[0].mxu0
    %252 = vdwg.mxu0
    %v253 = vld [vmem:[%s5] sm:$0x1]
    %v255 = vlaneseq
    %v256 = vshrl.u32 %v255, 7
    %v257 = vsub.s32 0, %v256
    %v258 = vrot.slane %v253, %v257
    %v260 = vadd.f32 %v250, %v258
    %v261 = vmax.f32 %v260, 0.0
    %v262 = vld [vmem:[#allocation4] sm:$0xff]
    %v263 = vld [vmem:[#allocation4 + $0x8] sm:$0xff]
    %v264 = vld [vmem:[#allocation4 + $0x10] sm:$0xff]
    %v265 = vld [vmem:[#allocation4 + $0x18] sm:$0xff]
    %v266 = vld [vmem:[#allocation4 + $0x20] sm:$0xff]
    %v267 = vld [vmem:[#allocation4 + $0x28] sm:$0xff]
    %v268 = vld [vmem:[#allocation4 + $0x30] sm:$0xff]
    %v269 = vld [vmem:[#allocation4 + $0x38] sm:$0xff]
    %v270 = vld [vmem:[#allocation4 + $0x40] sm:$0xff]
    %v271 = vld [vmem:[#allocation4 + $0x48] sm:$0xff]
    %v272 = vld [vmem:[#allocation4 + $0x50] sm:$0xff]
    %v273 = vld [vmem:[#allocation4 + $0x58] sm:$0xff]
    %v274 = vld [vmem:[#allocation4 + $0x60] sm:$0xff]
    %v275 = vld [vmem:[#allocation4 + $0x68] sm:$0xff]
    %v276 = vld [vmem:[#allocation4 + $0x70] sm:$0xff]
    %v277 = vld [vmem:[#allocation4 + $0x78] sm:$0xff]
    %v278 = vld [vmem:[%s7] sm:$0x1]
    %v280 = vlaneseq
    %v281 = vshrl.u32 %v280, 7
    %v282 = vsub.s32 0, %v281
    %v283 = vrot.slane %v278, %v282
    %285 = vmatprep.subr.mxu0 0.0
    %286 = vmatpush1.msra.mxu0 %v262
    %287 = vmatprep.subr.mxu0 0.0
    %288 = vmatpush1.msra.mxu0 %v263
    %289 = vmatprep.subr.mxu0 0.0
    %290 = vmatpush1.msra.mxu0 %v264
    %291 = vmatprep.subr.mxu0 0.0
    %292 = vmatpush1.msra.mxu0 %v265
    %293 = vmatprep.subr.mxu0 0.0
    %294 = vmatpush1.msra.mxu0 %v266
    %295 = vmatprep.subr.mxu0 0.0
    %296 = vmatpush1.msra.mxu0 %v267
    %297 = vmatprep.subr.mxu0 0.0
    %298 = vmatpush1.msra.mxu0 %v268
    %299 = vmatprep.subr.mxu0 0.0
    %300 = vmatpush1.msra.mxu0 %v269
    %301 = vmatprep.subr.mxu0 0.0
    %302 = vmatpush1.msra.mxu0 %v270
    %303 = vmatprep.subr.mxu0 0.0
    %304 = vmatpush1.msra.mxu0 %v271
    %305 = vmatprep.subr.mxu0 0.0
    %306 = vmatpush1.msra.mxu0 %v272
    %307 = vmatprep.subr.mxu0 0.0
    %308 = vmatpush1.msra.mxu0 %v273
    %309 = vmatprep.subr.mxu0 0.0
    %310 = vmatpush1.msra.mxu0 %v274
    %311 = vmatprep.subr.mxu0 0.0
    %312 = vmatpush1.msra.mxu0 %v275
    %313 = vmatprep.subr.mxu0 0.0
    %314 = vmatpush1.msra.mxu0 %v276
    %315 = vmatprep.subr.mxu0 0.0
    %316 = vmatpush1.msra.mxu0 %v277
    %317 = vmatprep.subr.mxu0 0.0
    %318 = vmatpush1.msra.mxu0 0.0
    %319 = vmatprep.subr.mxu0 0.0
    %320 = vmatpush1.msra.mxu0 0.0
    %321 = vmatprep.subr.mxu0 0.0
    %322 = vmatpush1.msra.mxu0 0.0
    %323 = vmatprep.subr.mxu0 0.0
    %324 = vmatpush1.msra.mxu0 0.0
    %325 = vmatprep.subr.mxu0 0.0
    %326 = vmatpush1.msra.mxu0 0.0
    %327 = vmatprep.subr.mxu0 0.0
    %328 = vmatpush1.msra.mxu0 0.0
    %329 = vmatprep.subr.mxu0 0.0
    %330 = vmatpush1.msra.mxu0 0.0
    %331 = vmatprep.subr.mxu0 0.0
    %332 = vmatpush1.msra.mxu0 0.0
    %333 = vmatprep.subr.mxu0 0.0
    %334 = vmatpush1.msra.mxu0 0.0
    %335 = vmatprep.subr.mxu0 0.0
    %336 = vmatpush1.msra.mxu0 0.0
    %337 = vmatprep.subr.mxu0 0.0
    %338 = vmatpush1.msra.mxu0 0.0
    %339 = vmatprep.subr.mxu0 0.0
    %340 = vmatpush1.msra.mxu0 0.0
    %341 = vmatprep.subr.mxu0 0.0
    %342 = vmatpush1.msra.mxu0 0.0
    %343 = vmatprep.subr.mxu0 0.0
    %344 = vmatpush1.msra.mxu0 0.0
    %345 = vmatprep.subr.mxu0 0.0
    %346 = vmatpush1.msra.mxu0 0.0
    %347 = vmatprep.subr.mxu0 0.0
    %348 = vmatpush1.msra.mxu0 0.0
    %349 = vmatprep.mubr.f32.mxu0 0.0
    %350 = vmatmul.mubr.f32.gmra.mrb[0].mxu0 %v261
    %v351 = vpop.f32.mrb[0].mxu0
    %v352 = vadd.f32 %v283, %v351
    %v353 = vpop.f32.mrb[0].mxu0
    %354 = vdwg.mxu0
    %v355 = vmax.f32 %v352, 0.0
    %v356 = vld [vmem:[#allocation6] sm:$0xff]
    %v357 = vld [vmem:[#allocation6 + $0x8] sm:$0xff]
    %v358 = vld [vmem:[#allocation6 + $0x10] sm:$0xff]
    %v359 = vld [vmem:[#allocation6 + $0x18] sm:$0xff]
    %v360 = vld [vmem:[#allocation6 + $0x20] sm:$0xff]
    %v361 = vld [vmem:[#allocation6 + $0x28] sm:$0xff]
    %v362 = vld [vmem:[#allocation6 + $0x30] sm:$0xff]
    %v363 = vld [vmem:[#allocation6 + $0x38] sm:$0xff]
    %v364 = vld [vmem:[#allocation6 + $0x40] sm:$0xff]
    %v365 = vld [vmem:[#allocation6 + $0x48] sm:$0xff]
    %v366 = vld [vmem:[#allocation6 + $0x50] sm:$0xff]
    %v367 = vld [vmem:[#allocation6 + $0x58] sm:$0xff]
    %v368 = vld [vmem:[#allocation6 + $0x60] sm:$0xff]
    %v369 = vld [vmem:[#allocation6 + $0x68] sm:$0xff]
    %v370 = vld [vmem:[#allocation6 + $0x70] sm:$0xff]
    %v371 = vld [vmem:[#allocation6 + $0x78] sm:$0xff]
    %v372 = vld [vmem:[%s9] sm:$0x1]
    %v374 = vlaneseq
    %v375 = vshrl.u32 %v374, 7
    %v376 = vsub.s32 0, %v375
    %v377 = vrot.slane %v372, %v376
    %379 = vmatprep.subr.mxu0 0.0
    %380 = vmatpush1.msra.mxu0 %v356
    %381 = vmatprep.subr.mxu0 0.0
    %382 = vmatpush1.msra.mxu0 %v357
    %383 = vmatprep.subr.mxu0 0.0
    %384 = vmatpush1.msra.mxu0 %v358
    %385 = vmatprep.subr.mxu0 0.0
    %386 = vmatpush1.msra.mxu0 %v359
    %387 = vmatprep.subr.mxu0 0.0
    %388 = vmatpush1.msra.mxu0 %v360
    %389 = vmatprep.subr.mxu0 0.0
    %390 = vmatpush1.msra.mxu0 %v361
    %391 = vmatprep.subr.mxu0 0.0
    %392 = vmatpush1.msra.mxu0 %v362
    %393 = vmatprep.subr.mxu0 0.0
    %394 = vmatpush1.msra.mxu0 %v363
    %395 = vmatprep.subr.mxu0 0.0
    %396 = vmatpush1.msra.mxu0 %v364
    %397 = vmatprep.subr.mxu0 0.0
    %398 = vmatpush1.msra.mxu0 %v365
    %399 = vmatprep.subr.mxu0 0.0
    %400 = vmatpush1.msra.mxu0 %v366
    %401 = vmatprep.subr.mxu0 0.0
    %402 = vmatpush1.msra.mxu0 %v367
    %403 = vmatprep.subr.mxu0 0.0
    %404 = vmatpush1.msra.mxu0 %v368
    %405 = vmatprep.subr.mxu0 0.0
    %406 = vmatpush1.msra.mxu0 %v369
    %407 = vmatprep.subr.mxu0 0.0
    %408 = vmatpush1.msra.mxu0 %v370
    %409 = vmatprep.subr.mxu0 0.0
    %410 = vmatpush1.msra.mxu0 %v371
    %411 = vmatprep.subr.mxu0 0.0
    %412 = vmatpush1.msra.mxu0 0.0
    %413 = vmatprep.subr.mxu0 0.0
    %414 = vmatpush1.msra.mxu0 0.0
    %415 = vmatprep.subr.mxu0 0.0
    %416 = vmatpush1.msra.mxu0 0.0
    %417 = vmatprep.subr.mxu0 0.0
    %418 = vmatpush1.msra.mxu0 0.0
    %419 = vmatprep.subr.mxu0 0.0
    %420 = vmatpush1.msra.mxu0 0.0
    %421 = vmatprep.subr.mxu0 0.0
    %422 = vmatpush1.msra.mxu0 0.0
    %423 = vmatprep.subr.mxu0 0.0
    %424 = vmatpush1.msra.mxu0 0.0
    %425 = vmatprep.subr.mxu0 0.0
    %426 = vmatpush1.msra.mxu0 0.0
    %427 = vmatprep.subr.mxu0 0.0
    %428 = vmatpush1.msra.mxu0 0.0
    %429 = vmatprep.subr.mxu0 0.0
    %430 = vmatpush1.msra.mxu0 0.0
    %431 = vmatprep.subr.mxu0 0.0
    %432 = vmatpush1.msra.mxu0 0.0
    %433 = vmatprep.subr.mxu0 0.0
    %434 = vmatpush1.msra.mxu0 0.0
    %435 = vmatprep.subr.mxu0 0.0
    %436 = vmatpush1.msra.mxu0 0.0
    %437 = vmatprep.subr.mxu0 0.0
    %438 = vmatpush1.msra.mxu0 0.0
    %439 = vmatprep.subr.mxu0 0.0
    %440 = vmatpush1.msra.mxu0 0.0
    %441 = vmatprep.subr.mxu0 0.0
    %442 = vmatpush1.msra.mxu0 0.0
    %443 = vmatprep.mubr.f32.mxu0 0.0
    %444 = vmatmul.mubr.f32.gmra.mrb[0].mxu0 %v355
    %v445 = vpop.f32.mrb[0].mxu0
    %v446 = vadd.f32 %v377, %v445
    %v447 = vpop.f32.mrb[0].mxu0
    %448 = vdwg.mxu0
    %v449 = vmax.f32 %v446, 0.0
    %v450 = vld [vmem:[%s89] sm:$0x1]
    %v452 = vlaneseq
    %v453 = vshrl.u32 %v452, 7
    %v454 = vsub.s32 0, %v453
    %v455 = vrot.slane %v450, %v454
    %v457 = vmul.f32 %v449, %v455
    %458 = vadd.xlane.f32.xlu0 %v457
    %v459 = vpop.xlane.xlu0 %458
    %v460 = vld [vmem:[%s94] sm:$0x1]
    %v462 = vlaneseq
    %v463 = vshrl.u32 %v462, 7
    %v464 = vsub.s32 0, %v463
    %v465 = vrot.slane %v460, %v464
    %v467 = vadd.f32 %v459, %v465
    %vm468 = vcmask 7168
    %469 = vst.msk [vmem:[%s12] sm:$0xff] %vm468, %v467
    // Predicated region
    $region54: #{tpu_custom_call.1} parent=1 // pred_check
      _
    $region55: #{tpu_custom_call.1} parent=1 // pred_check_branch
      %471 = sbr.rel (0) target = $region57
    $region56: #{tpu_custom_call.1} parent=1 // pred_region
      _
    $region57: #{tpu_custom_call.1} parent=1 // pred_fallthru
      _
    // Predicated region
    $region58: #{tpu_custom_call.1} parent=1 // pred_check
      _
    $region59: #{tpu_custom_call.1} parent=1 // pred_check_branch
      %473 = sbr.rel (0) target = $region61
    $region60: #{tpu_custom_call.1} parent=1 // pred_region
      _
    $region61: #{tpu_custom_call.1} parent=1 // pred_fallthru
      _
    %474 = vsyncpa [#allocation5], 1
    %475 = vsyncpa [#allocation7], 1

</llo_original>
